<compile_context>
chip_gen: v7x
topology: tpu7x:2x2x1
jax: 0.10.0
libtpu: 0.0.40
codegen_flags: <defaults>
</compile_context>

<pallas_src>
import functools

import numpy as np

import jax
import jax.numpy as jnp
from jax import lax
from jax.experimental import pallas as pl
from jax.experimental.pallas import tpu as pltpu


def _detail_loss_kernel(x_ref, y_ref, m_ref, out_ref, acc_ref, *,
                        img_w, n_blocks, blocks_per_slot, num_slots):
    """One grid step: acc += |Sobel_x(x-y)| + |Sobel_y(x-y)| over the block.

    x_ref/y_ref: (tb, H*W) blocks -- each sublane row is one flattened image.
    m_ref:       (4, H*W) zero-border masks (rows: top, bottom, left, right).
    out_ref:     (8, 128) per-slot partial-sum tile (written at finalize).
    acc_ref:     (tb, H*W) f32 accumulator (persists across the sweep).
    """
    i = pl.program_id(1)

    @pl.when(i == 0)
    def _init():
        acc_ref[...] = jnp.zeros_like(acc_ref)

    def _compute():
        _, hw = x_ref.shape
        w = img_w

        # Sobel is linear: Gx(x) - Gx(y) == Gx(x - y) (same for Gy).
        diff = x_ref[...].astype(jnp.float32) - y_ref[...].astype(jnp.float32)

        # (1, hw) boundary masks: zero every stencil tap that falls outside
        # the image -- this *is* the conv2d padding=1 zero border, applied
        # in-register instead of via a padded VMEM scratch.
        mt = m_ref[0:1, :]   # 0 on image row 0     (no r-1 neighbour)
        mb = m_ref[1:2, :]   # 0 on image row H-1   (no r+1 neighbour)
        ml = m_ref[2:3, :]   # 0 on image col 0     (no c-1 neighbour)
        mr = m_ref[3:4, :]   # 0 on image col W-1   (no c+1 neighbour)

        # Each image is one lane row, so every shift is a lane roll.
        # np.roll semantics: out[l] = in[l - shift].
        up = pltpu.roll(diff, w % hw, 1) * mt             # value at (r-1, c)
        down = pltpu.roll(diff, (hw - w) % hw, 1) * mb    # value at (r+1, c)
        t = up + 2.0 * diff + down       # vertical [1, 2, 1] smoothing
        u = down - up                    # vertical [-1, 0, 1] difference

        t_l = pltpu.roll(t, 1 % hw, 1) * ml               # t at (r, c-1)
        t_r = pltpu.roll(t, (hw - 1) % hw, 1) * mr        # t at (r, c+1)
        u_l = pltpu.roll(u, 1 % hw, 1) * ml
        u_r = pltpu.roll(u, (hw - 1) % hw, 1) * mr

        gx = t_r - t_l                   # Sobel-x response of (x - y)
        gy = u_l + 2.0 * u + u_r         # Sobel-y response of (x - y)

        # Block-shaped accumulator: per-step work is pure VPU adds; the single
        # cross-lane/sublane reduction happens once per sweep in _finalize.
        acc_ref[...] += jnp.abs(gx) + jnp.abs(gy)

    if num_slots * blocks_per_slot != n_blocks:
        # Odd split: the last slot owns one clamped/duplicated block; skip it.
        blk = pl.program_id(0) * blocks_per_slot + i
        pl.when(blk < n_blocks)(_compute)
    else:
        _compute()

    @pl.when(i == blocks_per_slot - 1)
    def _finalize():
        out_ref[...] = jnp.full(out_ref.shape, jnp.sum(acc_ref[...]),
                                dtype=out_ref.dtype)


def _choose_block_rows(nc, max_rows):
    """Largest divisor of nc that is a multiple of 8 (or == nc) and <= max_rows.

    An exact divisor means every block is full, so the kernel needs no
    per-step tail masking (iota + compare + select).
    """
    best = 0
    for d in range(1, nc + 1):
        if nc % d:
            continue
        if (d % 8 == 0 or d == nc) and d <= max_rows:
            best = max(best, d)
    if best:
        return best
    for d in range(1, nc + 1):  # nothing under the target: smallest legal one
        if nc % d == 0 and (d % 8 == 0 or d == nc):
            return d
    return nc


def _num_tensorcores():
    """Best-effort TensorCore count (2 on v7x, 1 on v5e/v6e); defaults to 1."""
    try:
        info = pltpu.get_tpu_info()
        for name in ("num_cores", "core_count", "num_tensorcores",
                     "tensor_core_count"):
            n = getattr(info, name, None)
            if isinstance(n, int) and n > 0:
                return n
    except Exception:
        pass
    try:
        if "v7" in jax.devices()[0].device_kind.lower():
            return 2
    except Exception:
        pass
    return 1


def detail_loss(x, y, *, target_block_bytes=4 << 20):
    """Pallas TPU DetailLoss: mean|Gx(x)-Gx(y)| + mean|Gy(x)-Gy(y)| (float32)."""
    assert x.shape == y.shape and x.ndim == 4
    B, C, H, W = x.shape
    NC = B * C
    HW = H * W

    # Zero-copy lane-dense view: (N, C, H, W) -> (N*C, H*W).
    xf = x.reshape(NC, HW)
    yf = y.reshape(NC, HW)

    # Zero-border (padding=1) masks, one lane per pixel; baked as a constant.
    lane = np.arange(HW)
    row, col = lane // W, lane % W
    masks = jnp.asarray(np.stack([row != 0, row != H - 1,
                                  col != 0, col != W - 1]).astype(np.float32))

    # Dtype-aware block sizing: ~target_block_bytes of *input* bytes per block
    # per operand (>= one (8, lanes) tile), with tb an exact divisor of N*C.
    itemsize = jnp.dtype(x.dtype).itemsize
    lanes_padded = -(-HW // 128) * 128
    row_bytes = lanes_padded * itemsize
    tb_target = max(8, int(target_block_bytes // max(row_bytes, 1)))
    tb = _choose_block_rows(NC, tb_target)
    n_blocks = NC // tb
    # TODO(synk): for very large H*W (one 8-row block over ~8 MiB) the lane
    # axis would need column tiling with halo handling; not implemented.

    # One output slot per TensorCore (2 on v7x megacore, 1 on v5e/v6e).
    num_slots = 2 if (_num_tensorcores() >= 2 and n_blocks >= 2) else 1
    bpc = -(-n_blocks // num_slots)
    need_clamp = (num_slots * bpc != n_blocks)

    def in_map(p, i):
        blk = p * bpc + i
        if need_clamp:
            blk = jnp.minimum(blk, n_blocks - 1)   # never DMA past the array
        return (blk, 0)

    # VMEM budget: 2 operands x 2 pipeline buffers x block + masks + f32
    # accumulator + headroom; capped at 64 MiB (v7x-safe, roomy on v5e/v6e).
    tb_padded = -(-tb // 8) * 8
    in_blk_bytes = tb_padded * lanes_padded * itemsize
    acc_bytes = tb_padded * lanes_padded * 4
    mask_bytes = 8 * lanes_padded * 4
    est = 4 * in_blk_bytes + acc_bytes + 2 * mask_bytes + (4 << 20)
    vmem_limit = int(min(64 << 20, max(32 << 20, est)))

    kernel = functools.partial(_detail_loss_kernel, img_w=W,
                               n_blocks=n_blocks, blocks_per_slot=bpc,
                               num_slots=num_slots)

    partials = pl.pallas_call(
        kernel,
        out_shape=jax.ShapeDtypeStruct((num_slots * 8, 128), jnp.float32),
        grid=(num_slots, bpc),
        in_specs=[
            # NOTE(v7x): if a profile still shows exposed DMA at these block
            # sizes, sweep pipeline_mode=pl.Buffered(3) on these two specs.
            pl.BlockSpec((tb, HW), in_map),
            pl.BlockSpec((tb, HW), in_map),
            pl.BlockSpec((4, HW), lambda p, i: (0, 0)),    # masks: DMA'd once
        ],
        out_specs=pl.BlockSpec((8, 128), lambda p, i: (p, 0)),
        scratch_shapes=[pltpu.VMEM((tb, HW), jnp.float32)],
        compiler_params=pltpu.CompilerParams(
            dimension_semantics=("parallel", "arbitrary"),
            vmem_limit_bytes=vmem_limit),
    )(xf, yf, masks)

    total = jnp.sum(partials[::8, 0])
    # l1(gx_x, gx_y) + l1(gy_x, gy_y): both means share the same divisor.
    return total / jnp.float32(NC * HW)


def _reference_detail_loss(x, y):
    """Independent reference: depthwise 3x3 conv via lax.conv_general_dilated."""
    sobel_x = jnp.array([[-1., 0., 1.], [-2., 0., 2.], [-1., 0., 1.]],
                        jnp.float32)
    sobel_y = jnp.array([[-1., -2., -1.], [0., 0., 0.], [1., 2., 1.]],
                        jnp.float32)
    C = x.shape[1]

    def conv(img, k):
        kern = jnp.broadcast_to(k[None, None], (C, 1, 3, 3))
        return lax.conv_general_dilated(
            img.astype(jnp.float32), kern,
            window_strides=(1, 1), padding=((1, 1), (1, 1)),
            dimension_numbers=("NCHW", "OIHW", "NCHW"),
            feature_group_count=C,
            precision=lax.Precision.HIGHEST)

    gx_x, gy_x = conv(x, sobel_x), conv(x, sobel_y)
    gx_y, gy_y = conv(y, sobel_x), conv(y, sobel_y)
    return jnp.mean(jnp.abs(gx_x - gx_y)) + jnp.mean(jnp.abs(gy_x - gy_y))


if __name__ == "__main__":
    key = jax.random.PRNGKey(0)
    kx, ky = jax.random.split(key)
    B, C, H, W = 2, 4, 16, 16
    x = jax.random.normal(kx, (B, C, H, W), dtype=jnp.float32)
    y = jax.random.normal(ky, (B, C, H, W), dtype=jnp.float32)

    out = jax.jit(detail_loss)(x, y)
    out = jax.block_until_ready(out)

    ref = jax.block_until_ready(_reference_detail_loss(x, y))
    assert jnp.allclose(out, ref, rtol=1e-4, atol=1e-5), (out, ref)
    print("KERNEL_OK")
</pallas_src>

<mosaic_0001>
module attributes {stable_mosaic.version = 11 : i64} {
  func.func @_detail_loss_kernel(%arg0: i32, %arg1: i32, %arg2: memref<8x256xf32, #tpu.memory_space<vmem>>, %arg3: memref<8x256xf32, #tpu.memory_space<vmem>>, %arg4: memref<4x256xf32, #tpu.memory_space<vmem>>, %arg5: memref<8x128xf32, #tpu.memory_space<vmem>>, %arg6: memref<8x256xf32, #tpu.memory_space<vmem>>) attributes {dimension_semantics = [#tpu.dimension_semantics<parallel>, #tpu.dimension_semantics<arbitrary>], iteration_bounds = array<i64: 1, 1>, scalar_prefetch = 0 : i64, scratch_operands = 1 : i64, tpu.core_type = #tpu.core_type<tc>, window_params = [{transform_indices = @transform_0, window_bounds = array<i64: 8, 256>}, {transform_indices = @transform_1, window_bounds = array<i64: 8, 256>}, {pipeline_mode = #tpu.pipeline_mode<synchronous>, transform_indices = @transform_2, window_bounds = array<i64: 4, 256>}, {transform_indices = @transform_3, window_bounds = array<i64: 8, 128>}]} {
    %c0_i32 = arith.constant 0 : i32
    %0 = arith.cmpi eq, %arg1, %c0_i32 : i32
    %1 = arith.extui %0 : i1 to i32
    %c0_i32_0 = arith.constant 0 : i32
    %2 = arith.cmpi ne, %1, %c0_i32_0 : i32
    scf.if %2 {
      %cst_18 = arith.constant 0.000000e+00 : f32
      %47 = vector.broadcast %cst_18 : f32 to vector<8x256xf32>
      %c0_19 = arith.constant 0 : index
      %c0_20 = arith.constant 0 : index
      %48 = vector.load %arg6[%c0_19, %c0_20] : memref<8x256xf32, #tpu.memory_space<vmem>>, vector<8x256xf32>
      tpu.vector_store %arg6[%c0_19, %c0_20], %47 {strides = array<i32>} : memref<8x256xf32, #tpu.memory_space<vmem>>, vector<8x256xf32>,
    } else {
    }
    %c0 = arith.constant 0 : index
    %c0_1 = arith.constant 0 : index
    %3 = vector.load %arg2[%c0, %c0_1] : memref<8x256xf32, #tpu.memory_space<vmem>>, vector<8x256xf32>
    %c0_2 = arith.constant 0 : index
    %c0_3 = arith.constant 0 : index
    %4 = vector.load %arg3[%c0_2, %c0_3] : memref<8x256xf32, #tpu.memory_space<vmem>>, vector<8x256xf32>
    %5 = arith.subf %3, %4 : vector<8x256xf32>
    %c0_4 = arith.constant 0 : index
    %c0_5 = arith.constant 0 : index
    %6 = vector.load %arg4[%c0_4, %c0_5] : memref<4x256xf32, #tpu.memory_space<vmem>>, vector<1x256xf32>
    %c1 = arith.constant 1 : index
    %c0_6 = arith.constant 0 : index
    %7 = vector.load %arg4[%c1, %c0_6] : memref<4x256xf32, #tpu.memory_space<vmem>>, vector<1x256xf32>
    %c2 = arith.constant 2 : index
    %c0_7 = arith.constant 0 : index
    %8 = vector.load %arg4[%c2, %c0_7] : memref<4x256xf32, #tpu.memory_space<vmem>>, vector<1x256xf32>
    %c3 = arith.constant 3 : index
    %c0_8 = arith.constant 0 : index
    %9 = vector.load %arg4[%c3, %c0_8] : memref<4x256xf32, #tpu.memory_space<vmem>>, vector<1x256xf32>
    %c16_i32 = arith.constant 16 : i32
    %10 = tpu.dynamic_rotate %5 by %c16_i32 dim 1 : vector<8x256xf32>, i32 -> vector<8x256xf32>
    %11 = vector.broadcast %6 : vector<1x256xf32> to vector<8x256xf32>
    %12 = arith.mulf %10, %11 : vector<8x256xf32>
    %c240_i32 = arith.constant 240 : i32
    %13 = tpu.dynamic_rotate %5 by %c240_i32 dim 1 : vector<8x256xf32>, i32 -> vector<8x256xf32>
    %14 = vector.broadcast %7 : vector<1x256xf32> to vector<8x256xf32>
    %15 = arith.mulf %13, %14 : vector<8x256xf32>
    %cst = arith.constant 2.000000e+00 : f32
    %16 = vector.broadcast %cst : f32 to vector<8x256xf32>
    %17 = arith.mulf %16, %5 : vector<8x256xf32>
    %18 = arith.addf %12, %17 : vector<8x256xf32>
    %19 = arith.addf %18, %15 : vector<8x256xf32>
    %20 = arith.subf %15, %12 : vector<8x256xf32>
    %c1_i32 = arith.constant 1 : i32
    %21 = tpu.dynamic_rotate %19 by %c1_i32 dim 1 : vector<8x256xf32>, i32 -> vector<8x256xf32>
    %22 = vector.broadcast %8 : vector<1x256xf32> to vector<8x256xf32>
    %23 = arith.mulf %21, %22 : vector<8x256xf32>
    %c255_i32 = arith.constant 255 : i32
    %24 = tpu.dynamic_rotate %19 by %c255_i32 dim 1 : vector<8x256xf32>, i32 -> vector<8x256xf32>
    %25 = vector.broadcast %9 : vector<1x256xf32> to vector<8x256xf32>
    %26 = arith.mulf %24, %25 : vector<8x256xf32>
    %c1_i32_9 = arith.constant 1 : i32
    %27 = tpu.dynamic_rotate %20 by %c1_i32_9 dim 1 : vector<8x256xf32>, i32 -> vector<8x256xf32>
    %28 = vector.broadcast %8 : vector<1x256xf32> to vector<8x256xf32>
    %29 = arith.mulf %27, %28 : vector<8x256xf32>
    %c255_i32_10 = arith.constant 255 : i32
    %30 = tpu.dynamic_rotate %20 by %c255_i32_10 dim 1 : vector<8x256xf32>, i32 -> vector<8x256xf32>
    %31 = vector.broadcast %9 : vector<1x256xf32> to vector<8x256xf32>
    %32 = arith.mulf %30, %31 : vector<8x256xf32>
    %33 = arith.subf %26, %23 : vector<8x256xf32>
    %cst_11 = arith.constant 2.000000e+00 : f32
    %34 = vector.broadcast %cst_11 : f32 to vector<8x256xf32>
    %35 = arith.mulf %34, %20 : vector<8x256xf32>
    %36 = arith.addf %29, %35 : vector<8x256xf32>
    %37 = arith.addf %36, %32 : vector<8x256xf32>
    %c0_12 = arith.constant 0 : index
    %c0_13 = arith.constant 0 : index
    %38 = vector.load %arg6[%c0_12, %c0_13] : memref<8x256xf32, #tpu.memory_space<vmem>>, vector<8x256xf32>
    %39 = math.absf %33 : vector<8x256xf32>
    %40 = math.absf %37 : vector<8x256xf32>
    %41 = arith.addf %39, %40 : vector<8x256xf32>
    %42 = arith.addf %38, %41 : vector<8x256xf32>
    %c0_14 = arith.constant 0 : index
    %c0_15 = arith.constant 0 : index
    %43 = vector.load %arg6[%c0_14, %c0_15] : memref<8x256xf32, #tpu.memory_space<vmem>>, vector<8x256xf32>
    tpu.vector_store %arg6[%c0_14, %c0_15], %42 {strides = array<i32>} : memref<8x256xf32, #tpu.memory_space<vmem>>, vector<8x256xf32>,
    %c0_i32_16 = arith.constant 0 : i32
    %44 = arith.cmpi eq, %arg1, %c0_i32_16 : i32
    %45 = arith.extui %44 : i1 to i32
    %c0_i32_17 = arith.constant 0 : i32
    %46 = arith.cmpi ne, %45, %c0_i32_17 : i32
    scf.if %46 {
      %c0_18 = arith.constant 0 : index
      %c0_19 = arith.constant 0 : index
      %47 = vector.load %arg6[%c0_18, %c0_19] : memref<8x256xf32, #tpu.memory_space<vmem>>, vector<8x256xf32>
      %48 = vector.shape_cast %47 : vector<8x256xf32> to vector<1x8x256xf32>
      %cst_20 = arith.constant dense<0.000000e+00> : vector<1xf32>
      %49 = vector.multi_reduction <add>, %48, %cst_20 [1, 2] : vector<1x8x256xf32> to vector<1xf32>
      %50 = vector.shape_cast %49 : vector<1xf32> to vector<1x1x1xf32>
      %51 = vector.extract %50[0, 0, 0] : f32 from vector<1x1x1xf32>
      %52 = vector.broadcast %51 : f32 to vector<8x128xf32>
      %c0_21 = arith.constant 0 : index
      %c0_22 = arith.constant 0 : index
      %53 = vector.load %arg5[%c0_21, %c0_22] : memref<8x128xf32, #tpu.memory_space<vmem>>, vector<8x128xf32>
      tpu.vector_store %arg5[%c0_21, %c0_22], %52 {strides = array<i32>} : memref<8x128xf32, #tpu.memory_space<vmem>>, vector<8x128xf32>,
    } else {
    }
    return
  }
  func.func @transform_0(%arg0: i32, %arg1: i32) -> (i32, i32) {
    %c1_i32 = arith.constant 1 : i32
    %0 = arith.muli %arg0, %c1_i32 : i32
    %1 = arith.addi %0, %arg1 : i32
    %c0_i32 = arith.constant 0 : i32
    %c0_i32_0 = arith.constant 0 : i32
    return %1, %c0_i32 : i32, i32
  }
  func.func @transform_1(%arg0: i32, %arg1: i32) -> (i32, i32) {
    %c1_i32 = arith.constant 1 : i32
    %0 = arith.muli %arg0, %c1_i32 : i32
    %1 = arith.addi %0, %arg1 : i32
    %c0_i32 = arith.constant 0 : i32
    %c0_i32_0 = arith.constant 0 : i32
    return %1, %c0_i32 : i32, i32
  }
  func.func @transform_2(%arg0: i32, %arg1: i32) -> (i32, i32) {
    %c0_i32 = arith.constant 0 : i32
    %c0_i32_0 = arith.constant 0 : i32
    %c0_i32_1 = arith.constant 0 : i32
    return %c0_i32, %c0_i32_0 : i32, i32
  }
  func.func @transform_3(%arg0: i32, %arg1: i32) -> (i32, i32) {
    %c0_i32 = arith.constant 0 : i32
    %c0_i32_0 = arith.constant 0 : i32
    return %arg0, %c0_i32 : i32, i32
  }
}

</mosaic_0001>

<llo_original>
// kernel: detail_loss.1
$region0: #{detail_loss.1}
  #allocation0 [shape = 'u32[]', space=smem, size = 0x4, offset = 0x4, fixed_abs, tag = 'smem constant byte address 0x4 - core index']
  #allocation1 [shape = 'u32[144,128]{1,0:T(1,128)}', space=vmem, size = 0x12000, scoped, tag = 'internal scratch']
  #allocation2 [shape = 'f32[8,256]{1,0:T(8,128)}', space=vmem, size = 0x2000, scoped, tag = 'scratch operand']
  %s0 = inlined_call_operand.vmem [shape: f32[8,256], index: 0, kind: input, shape index: {}]
  %s1 = inlined_call_operand.vmem [shape: f32[8,256], index: 1, kind: input, shape index: {}]
  %s2 = inlined_call_operand.vmem [shape: f32[4,256], index: 2, kind: input, shape index: {}]
  %s3 = inlined_call_operand.vmem [shape: f32[8,128], index: 3, kind: output, shape index: {}]
  %s4 = sld [smem:[#allocation0]]
  $region30: #{detail_loss.1} parent=0
    _
  %s6 = ssub.s32 1, %s4
  %s7 = scalar_select 0, %s6, %s4
  // Predicated region
  $region2: #{detail_loss.1} parent=0 // pred_check
    _
  $region3: #{detail_loss.1} parent=0 // pred_check_branch
    %9 = sbr.rel (0) target = $region5
  $region4: #{detail_loss.1} parent=0 // pred_region
    %s10 = sadd.s32 0, 0
    %p11 = scmp.lt.s32.totalorder %s10, 0
    %s12 = scalar_select %p11, %s10, 0
    %s13 = smul.addr %s12, 2
    %s14 = smul.addr %s13, 8
    %s15 = scalar_lea.vmem %s0, %s14
    %s16 = sadd.s32 0, 0
  $region5: #{detail_loss.1} parent=0 // pred_fallthru
    _
  // Predicated region
  $region6: #{detail_loss.1} parent=0 // pred_check
    _
  $region7: #{detail_loss.1} parent=0 // pred_check_branch
    %18 = sbr.rel (0) target = $region9
  $region8: #{detail_loss.1} parent=0 // pred_region
    %s19 = sadd.s32 0, 0
    %p20 = scmp.lt.s32.totalorder %s19, 0
    %s21 = scalar_select %p20, %s19, 0
    %s22 = smul.addr %s21, 2
    %s23 = smul.addr %s22, 8
    %s24 = scalar_lea.vmem %s1, %s23
    %s25 = sadd.s32 0, 0
  $region9: #{detail_loss.1} parent=0 // pred_fallthru
    _
  // Predicated region
  $region10: #{detail_loss.1} parent=0 // pred_check
    _
  $region11: #{detail_loss.1} parent=0 // pred_check_branch
    %27 = sbr.rel (0) target = $region13
  $region12: #{detail_loss.1} parent=0 // pred_region
    _
  $region13: #{detail_loss.1} parent=0 // pred_fallthru
    _
  %s28 = sadd.s32 0, 0
  %p29 = scmp.lt.s32.totalorder %s28, 0
  %s30 = scalar_select %p29, %s28, 0
  %s31 = smul.addr %s30, 2
  %s32 = smul.addr %s31, 8
  %s33 = scalar_lea.vmem %s0, %s32
  %s34 = sadd.s32 0, 0
  %p35 = scmp.lt.s32.totalorder %s34, 0
  %s36 = scalar_select %p35, %s34, 0
  %s37 = smul.addr %s36, 2
  %s38 = smul.addr %s37, 8
  %s39 = scalar_lea.vmem %s1, %s38
  %s40 = sadd.s32 0, 0
  %p41 = scmp.lt.s32.totalorder %s40, 0
  %s42 = scalar_select %p41, %s40, 0
  %s43 = smul.addr %s42, 2
  %s44 = smul.addr %s43, 8
  %s45 = scalar_lea.vmem %s0, %s44
  %s46 = sadd.s32 0, 0
  %s47 = sadd.s32 0, 0
  %p48 = scmp.lt.s32.totalorder %s47, 0
  %s49 = scalar_select %p48, %s47, 0
  %s50 = smul.addr %s49, 2
  %s51 = smul.addr %s50, 8
  %s52 = scalar_lea.vmem %s1, %s51
  %s53 = sadd.s32 0, 0
  %p54 = scmp.eq.s32.totalorder 0, 0
  // Predicated region
  $region14: #{detail_loss.1} parent=0 // pred_check
    %p55 = pneg %p54
  $region15: #{detail_loss.1} parent=0 // pred_check_branch
    %57 = sbr.rel (%p55) target = $region17
  $region16: #{detail_loss.1} parent=0 // pred_region
    %58 = vst [vmem:[#allocation2] sm:$0xff] 0.0
    %59 = vst [vmem:[#allocation2 + $0x8] sm:$0xff] 0.0
  $region17: #{detail_loss.1} parent=0 // pred_fallthru
    _
  %v60 = vld [vmem:[%s45] sm:$0xff]
  %v61 = vld [vmem:[%s45 + $0x8] sm:$0xff]
  %v62 = vld [vmem:[%s52] sm:$0xff]
  %v63 = vld [vmem:[%s52 + $0x8] sm:$0xff]
  %v64 = vsub.f32 %v60, %v62
  %v65 = vsub.f32 %v61, %v63
  %v66 = vld [vmem:[%s2] ss:$4 sm:$0x3]
  %s67 = scalar_lea.vmem %s2, 1
  %v68 = vld [vmem:[%s67] ss:$4 sm:$0x3]
  %s69 = scalar_lea.vmem %s2, 2
  %v70 = vld [vmem:[%s69] ss:$4 sm:$0x3]
  %s71 = scalar_lea.vmem %s2, 3
  %v72 = vld [vmem:[%s71] ss:$4 sm:$0x3]
  %73 = vrot.lane.b32.xlu0 %v64, 16
  %v74 = vpop.permute.xlu0 %73
  %75 = vrot.lane.b32.xlu0 %v65, 16
  %v76 = vpop.permute.xlu0 %75
  %v77 = vlaneseq
  %v78 = vand.u32 %v77, 127
  %vm79 = vcmp.lt.s32.totalorder %v78, 16
  %v80 = vsel %vm79, %v74, %v76
  %v81 = vsel %vm79, %v76, %v74
  %v83 = vlaneseq
  %v84 = vshrl.u32 %v83, 7
  %v85 = vsub.s32 0, %v84
  %v86 = vrot.slane %v66, %v85
  %v87 = vlaneseq
  %v88 = vshrl.u32 %v87, 7
  %v89 = vsub.s32 1, %v88
  %v90 = vrot.slane %v66, %v89
  %v93 = vmul.f32 %v81, %v86
  %v94 = vmul.f32 %v80, %v90
  %95 = vrot.lane.b32.xlu0 %v64, 112
  %v96 = vpop.permute.xlu0 %95
  %97 = vrot.lane.b32.xlu0 %v65, 112
  %v98 = vpop.permute.xlu0 %97
  %vm99 = vcmp.lt.s32.totalorder %v78, 112
  %v100 = vsel %vm99, %v96, %v98
  %v101 = vsel %vm99, %v98, %v96
  %v103 = vlaneseq
  %v104 = vshrl.u32 %v103, 7
  %v105 = vsub.s32 0, %v104
  %v106 = vrot.slane %v68, %v105
  %v107 = vlaneseq
  %v108 = vshrl.u32 %v107, 7
  %v109 = vsub.s32 1, %v108
  %v110 = vrot.slane %v68, %v109
  %v113 = vmul.f32 %v100, %v106
  %v114 = vmul.f32 %v101, %v110
  %v115 = vmul.f32 %v64, 2.0
  %v116 = vmul.f32 %v65, 2.0
  %v117 = vadd.f32 %v93, %v115
  %v118 = vadd.f32 %v94, %v116
  %v119 = vadd.f32 %v117, %v113
  %v120 = vadd.f32 %v118, %v114
  %v121 = vsub.f32 %v113, %v93
  %v122 = vsub.f32 %v114, %v94
  %123 = vrot.lane.b32.xlu0 %v119, 1
  %v124 = vpop.permute.xlu0 %123
  %125 = vrot.lane.b32.xlu0 %v120, 1
  %v126 = vpop.permute.xlu0 %125
  %vm127 = vcmp.lt.s32.totalorder %v78, 1
  %v128 = vsel %vm127, %v124, %v126
  %v129 = vsel %vm127, %v126, %v124
  %v131 = vlaneseq
  %v132 = vshrl.u32 %v131, 7
  %v133 = vsub.s32 0, %v132
  %v134 = vrot.slane %v70, %v133
  %v135 = vlaneseq
  %v136 = vshrl.u32 %v135, 7
  %v137 = vsub.s32 1, %v136
  %v138 = vrot.slane %v70, %v137
  %v141 = vmul.f32 %v129, %v134
  %v142 = vmul.f32 %v128, %v138
  %143 = vrot.lane.b32.xlu0 %v119, 127
  %v144 = vpop.permute.xlu0 %143
  %145 = vrot.lane.b32.xlu0 %v120, 127
  %v146 = vpop.permute.xlu0 %145
  %vm147 = vcmp.lt.s32.totalorder %v78, 127
  %v148 = vsel %vm147, %v144, %v146
  %v149 = vsel %vm147, %v146, %v144
  %v151 = vlaneseq
  %v152 = vshrl.u32 %v151, 7
  %v153 = vsub.s32 0, %v152
  %v154 = vrot.slane %v72, %v153
  %v155 = vlaneseq
  %v156 = vshrl.u32 %v155, 7
  %v157 = vsub.s32 1, %v156
  %v158 = vrot.slane %v72, %v157
  %v161 = vmul.f32 %v148, %v154
  %v162 = vmul.f32 %v149, %v158
  %163 = vrot.lane.b32.xlu0 %v121, 1
  %v164 = vpop.permute.xlu0 %163
  %165 = vrot.lane.b32.xlu0 %v122, 1
  %v166 = vpop.permute.xlu0 %165
  %v167 = vsel %vm127, %v164, %v166
  %v168 = vsel %vm127, %v166, %v164
  %v169 = vmul.f32 %v168, %v134
  %v170 = vmul.f32 %v167, %v138
  %171 = vrot.lane.b32.xlu0 %v121, 127
  %v172 = vpop.permute.xlu0 %171
  %173 = vrot.lane.b32.xlu0 %v122, 127
  %v174 = vpop.permute.xlu0 %173
  %v175 = vsel %vm147, %v172, %v174
  %v176 = vsel %vm147, %v174, %v172
  %v177 = vmul.f32 %v175, %v154
  %v178 = vmul.f32 %v176, %v158
  %v179 = vsub.f32 %v161, %v141
  %v180 = vsub.f32 %v162, %v142
  %v181 = vmul.f32 %v121, 2.0
  %v182 = vmul.f32 %v122, 2.0
  %v183 = vadd.f32 %v169, %v181
  %v184 = vadd.f32 %v170, %v182
  %v185 = vadd.f32 %v183, %v177
  %v186 = vadd.f32 %v184, %v178
  %v187 = vld [vmem:[#allocation2] sm:$0xff]
  %v188 = vld [vmem:[#allocation2 + $0x8] sm:$0xff]
  %v189 = vand.u32 2147483647, %v179
  %v190 = vand.u32 2147483647, %v180
  %v191 = vand.u32 2147483647, %v185
  %v192 = vand.u32 2147483647, %v186
  %v193 = vadd.f32 %v189, %v191
  %v194 = vadd.f32 %v190, %v192
  %v195 = vadd.f32 %v187, %v193
  %v196 = vadd.f32 %v188, %v194
  %197 = vst [vmem:[#allocation2] sm:$0xff] %v195
  %198 = vst [vmem:[#allocation2 + $0x8] sm:$0xff] %v196
  // Predicated region
  $region18: #{detail_loss.1} parent=0 // pred_check
    %p199 = pneg %p54
  $region19: #{detail_loss.1} parent=0 // pred_check_branch
    %201 = sbr.rel (%p199) target = $region21
  $region20: #{detail_loss.1} parent=0 // pred_region
    %v202 = vld [vmem:[#allocation2] sm:$0xff]
    %v203 = vld [vmem:[#allocation2 + $0x8] sm:$0xff]
    %v204 = vadd.f32 %v202, %v203
    %205 = vadd.xlane.f32.xlu0 %v204
    %v206 = vpop.xlane.xlu0 %205
    %v207 = vrot.slane %v206, 4
    %v208 = vadd.f32 %v206, %v207
    %v209 = vrot.slane %v208, 2
    %v210 = vadd.f32 %v208, %v209
    %v211 = vrot.slane %v210, 1
    %v212 = vadd.f32 %v210, %v211
    %s213 = vtos %v212
    %v214 = vstv %s213
    %215 = vst [vmem:[%s3] sm:$0xff] %v214
  $region21: #{detail_loss.1} parent=0 // pred_fallthru
    _
  // Predicated region
  $region22: #{detail_loss.1} parent=0 // pred_check
    _
  $region23: #{detail_loss.1} parent=0 // pred_check_branch
    %217 = sbr.rel (0) target = $region25
  $region24: #{detail_loss.1} parent=0 // pred_region
    _
  $region25: #{detail_loss.1} parent=0 // pred_fallthru
    _
  // Predicated region
  $region26: #{detail_loss.1} parent=0 // pred_check
    _
  $region27: #{detail_loss.1} parent=0 // pred_check_branch
    %219 = sbr.rel (0) target = $region29
  $region28: #{detail_loss.1} parent=0 // pred_region
    _
  $region29: #{detail_loss.1} parent=0 // pred_fallthru
    _

</llo_original>
